<compile_context>
chip_gen: v6e
topology: v6e:2x2x1
jax: 0.10.0
libtpu: 0.0.40
codegen_flags: <defaults>
</compile_context>

<pallas_src>
import numpy as np
import jax
import jax.numpy as jnp
from jax import lax
from jax.experimental import pallas as pl
from jax.experimental.pallas import tpu as pltpu

THRESHOLDS = {
    10: np.array([0.05, 0.1, 0.2]),
    35: np.array([0.14285714, 0.308571428, 0.5]),
    70: np.array([0.4285714, 0.57142858, 0.71428571]),
}
WEIGHTS = {10: (1, 2, 3, 30), 35: (1, 2, 3, 30), 70: (1, 2, 3, 30)}

LANE = 128
_UNROLL_LIMIT = 32          # unroll the in-kernel chunk loop up to this many chunks


def _vmem_capacity_bytes():
    try:
        return int(pltpu.get_tpu_info().vmem_capacity_bytes)
    except Exception:
        return 64 * 1024 * 1024        # conservative default: v7x per-TensorCore VMEM


def _choose_tile(D, rows, itemsize, budget_bytes, max_tile_lanes=None):
    """Largest TD with TD | D, TD % 128 == 0 and rows*TD*itemsize <= budget.
    D is already a multiple of 128 (wrapper pads), so TD=128 always works."""
    target = max(LANE, (budget_bytes // max(rows * itemsize, 1)) // LANE * LANE)
    if max_tile_lanes is not None:
        target = min(target, max(LANE, (max_tile_lanes // LANE) * LANE))
    if D <= target:
        return D
    td = (target // LANE) * LANE
    while td > LANE:
        if D % td == 0:
            return td
        td -= LANE
    return LANE


def _make_kernel(thresholds, bal_weights, mse_weight, mae_weight, n_chunks, chunk):
    t0, t1, t2 = (float(t) for t in thresholds)
    mse_w = float(mse_weight)
    mae_w = float(mae_weight)
    # Fold the global mse/mae weights into the baked select constants so the
    # inner loop pays at most one extra multiply.
    scale = mae_w if mae_w != 0.0 else (mse_w if mse_w != 0.0 else 1.0)
    b0, b1, b2, b3 = (float(b) * scale for b in bal_weights)
    r_mse = mse_w / scale
    r_mae = mae_w / scale

    def kernel(inp_ref, tgt_ref, out_ref):
        @pl.when(pl.program_id(1) == 0)
        def _init():
            out_ref[...] = jnp.zeros_like(out_ref)

        def chunk_contrib(lo):
            sl = pl.ds(lo, chunk)
            x = inp_ref[:, :, sl].astype(jnp.float32)
            t = jnp.clip(tgt_ref[:, :, sl].astype(jnp.float32), 0.0, 1.0)
            # balancing weights: nested select chain (3 cmp + 3 select),
            # constants pre-scaled by the folded mae/mse weight.
            w = jnp.where(t >= t2, b3,
                          jnp.where(t >= t1, b2,
                                    jnp.where(t >= t0, b1, b0)))
            d = x - t
            terms = []
            if r_mse != 0.0:
                sq = d * d
                if r_mse != 1.0:
                    sq = r_mse * sq
                terms.append(sq)
            if r_mae != 0.0:
                ad = jnp.abs(d)
                if r_mae != 1.0:
                    ad = r_mae * ad
                terms.append(ad)
            if not terms:
                core = jnp.zeros_like(d)
            elif len(terms) == 1:
                core = terms[0]
            else:
                core = terms[0] + terms[1]
            return w * core                     # (blkB, S, chunk)

        if n_chunks <= _UNROLL_LIMIT:
            acc = chunk_contrib(0)
            for j in range(1, n_chunks):
                acc = acc + chunk_contrib(j * chunk)
        else:
            def body(j, acc):
                lo = pl.multiple_of(j * chunk, chunk)   # chunk is a multiple of 128
                return acc + chunk_contrib(lo)
            acc = lax.fori_loop(1, n_chunks, body, chunk_contrib(0))

        # lane-dense accumulation into the resident output block
        out_ref[...] += acc.reshape(out_ref.shape)

    return kernel


def weighted_mse_mae(inp, tgt, *, factor=10, mse_weight=1.0, mae_weight=1.0,
                     NORMAL_LOSS_GLOBAL_SCALE=5e-5, LAMBDA=0.1,
                     max_tile_lanes=None, buffer_count=None):
    inp = jnp.asarray(inp)
    tgt = jnp.asarray(tgt)
    B, S, C, H, W = inp.shape
    D = C * H * W
    inp3 = inp.reshape(B, S, D)
    tgt3 = tgt.reshape(B, S, D)

    # Pad D up to a multiple of 128: padded lanes are zero in BOTH tensors, so
    # diff == 0 and they contribute exactly 0 to the loss.
    D_pad = ((D + LANE - 1) // LANE) * LANE
    if D_pad != D:
        # TODO(synk): the wrapper-side zero-pad materializes one extra HBM copy
        # for ragged D; an in-kernel lane mask on the last tile would avoid it.
        pad = ((0, 0), (0, 0), (0, D_pad - D))
        inp3 = jnp.pad(inp3, pad)
        tgt3 = jnp.pad(tgt3, pad)

    itemsize = max(inp3.dtype.itemsize, tgt3.dtype.itemsize)
    cap = _vmem_capacity_bytes()
    budget = min(8 * 1024 * 1024, max(2 * 1024 * 1024, cap // 12))
    TD = _choose_tile(D_pad, B * S, itemsize, budget, max_tile_lanes)
    n_tiles = D_pad // TD

    # Parallel split for v7x's two TensorCores (harmless elsewhere): prefer a
    # split over D tiles; fall back to a batch split so an odd tile count never
    # leaves the second core idle.
    if n_tiles >= 2 and n_tiles % 2 == 0:
        mode, NP, K, blkB = "dsplit", 2, n_tiles // 2, B
    elif B % 2 == 0:
        mode, NP, K, blkB = "bsplit", 2, n_tiles, B // 2
    else:
        mode, NP, K, blkB = "bsplit", 1, n_tiles, B

    # lane width of the resident accumulator / inner compute chunk
    chunk = next(c for c in (512, 256, 128) if TD % c == 0)
    n_chunks = TD // chunk

    kernel = _make_kernel(THRESHOLDS[factor], WEIGHTS[factor],
                          mse_weight, mae_weight, n_chunks, chunk)

    in_kwargs = {}
    if buffer_count is not None:          # v5e DMA-depth sweep knob
        in_kwargs["pipeline_mode"] = pl.Buffered(buffer_count)

    if mode == "dsplit":
        in_map = lambda p, k: (0, 0, p * K + k)
        in_specs = [pl.BlockSpec((B, S, TD), in_map, **in_kwargs),
                    pl.BlockSpec((B, S, TD), in_map, **in_kwargs)]
        out_spec = pl.BlockSpec((1, B, S, chunk), lambda p, k: (p, 0, 0, 0))
        out_shape = jax.ShapeDtypeStruct((NP, B, S, chunk), jnp.float32)
    else:
        in_map = lambda p, k: (p, 0, k)
        in_specs = [pl.BlockSpec((blkB, S, TD), in_map, **in_kwargs),
                    pl.BlockSpec((blkB, S, TD), in_map, **in_kwargs)]
        out_spec = pl.BlockSpec((blkB, S, chunk), lambda p, k: (p, 0, 0))
        out_shape = jax.ShapeDtypeStruct((B, S, chunk), jnp.float32)

    # Explicit scoped-VMEM limit: 2 inputs x buffers x block + output + slack,
    # kept safely below the physical per-core capacity.
    nbuf = buffer_count if buffer_count is not None else 2
    in_block_bytes = blkB * S * TD * itemsize
    out_block_bytes = blkB * S * chunk * 4
    vmem_limit = 2 * nbuf * in_block_bytes + 2 * out_block_bytes + (4 << 20)
    vmem_limit = int(min(max(vmem_limit, 16 << 20), int(cap * 0.9)))

    partials = pl.pallas_call(
        kernel,
        out_shape=out_shape,
        grid=(NP, K),
        in_specs=in_specs,
        out_specs=out_spec,
        compiler_params=pltpu.CompilerParams(
            dimension_semantics=("parallel", "arbitrary"),
            vmem_limit_bytes=vmem_limit),
    )(inp3, tgt3)

    # finish the tiny reductions in plain JAX (negligible work)
    if mode == "dsplit":
        per_bs = jnp.sum(partials, axis=(0, 3))     # (B, S)
    else:
        per_bs = jnp.sum(partials, axis=-1)         # (B, S)

    # sequence weighting: torch.arange(1, 1+S*lambda, lambda); w[:-10]=1; w=w[:14]
    if LAMBDA is not None:
        w = np.arange(1.0, 1.0 + S * LAMBDA, LAMBDA, dtype=np.float64)
        w[:-10] = 1.0
        w = w[:14]
        assert w.shape[0] == S, "sequence length must be 14 when LAMBDA is not None"
        per_bs = per_bs * jnp.asarray(w, jnp.float32)[None, :]

    return jnp.float32(NORMAL_LOSS_GLOBAL_SCALE) * jnp.mean(per_bs)


def _reference(inp, tgt, factor=10, mse_weight=1.0, mae_weight=1.0,
               scale=5e-5, lam=0.1):
    inp = np.asarray(inp, np.float32)
    tgt = np.clip(np.asarray(tgt, np.float32), 0.0, 1.0)
    bw = WEIGHTS[factor]
    th = THRESHOLDS[factor]
    weights = np.ones_like(inp) * bw[0]
    for i, t in enumerate(th):
        weights = weights + (bw[i + 1] - bw[i]) * (tgt >= t).astype(np.float32)
    mse = np.sum(weights * (inp - tgt) ** 2, axis=(2, 3, 4))
    mae = np.sum(weights * np.abs(inp - tgt), axis=(2, 3, 4))
    B, S = mse.shape
    if lam is not None:
        w = np.arange(1.0, 1.0 + S * lam, lam)
        w[:-10] = 1.0
        w = w[:14].astype(np.float32)
        mse = w * mse
        mae = w * mae
    return scale * (mse_weight * mse.mean() + mae_weight * mae.mean())


if __name__ == "__main__":
    key = jax.random.PRNGKey(0)
    k1, k2, k3, k4 = jax.random.split(key, 4)

    # S must be 14 for the module's LAMBDA sequence-weighting path (w = w[:14]).
    B, S, C, H, W = 2, 14, 4, 16, 16
    inp = jax.random.uniform(k1, (B, S, C, H, W), jnp.float32, minval=-0.2, maxval=1.2)
    tgt = jax.random.uniform(k2, (B, S, C, H, W), jnp.float32, minval=-0.2, maxval=1.2)
    ref = _reference(np.asarray(inp), np.asarray(tgt), factor=10)

    # 1) default tile selection (whole padded D in one block; batch parallel split).
    loss = jax.block_until_ready(weighted_mse_mae(inp, tgt, factor=10))
    np.testing.assert_allclose(np.asarray(loss), ref, rtol=5e-3, atol=1e-7)

    # 2) forced small tiles: D=1024 -> TD=256 -> grid (NP=2, K=2); exercises the
    #    D-tile parallel split and the resident accumulator across k.
    loss_t = jax.block_until_ready(
        weighted_mse_mae(inp, tgt, factor=10, max_tile_lanes=256))
    np.testing.assert_allclose(np.asarray(loss_t), ref, rtol=5e-3, atol=1e-7)

    # 3) ragged D (C*H*W = 300, not a multiple of 128) exercises the zero-pad path.
    inp_r = jax.random.uniform(k3, (2, 14, 3, 10, 10), jnp.float32, minval=-0.2, maxval=1.2)
    tgt_r = jax.random.uniform(k4, (2, 14, 3, 10, 10), jnp.float32, minval=-0.2, maxval=1.2)
    ref_r = _reference(np.asarray(inp_r), np.asarray(tgt_r), factor=10)
    loss_r = jax.block_until_ready(weighted_mse_mae(inp_r, tgt_r, factor=10))
    np.testing.assert_allclose(np.asarray(loss_r), ref_r, rtol=5e-3, atol=1e-7)

    print("KERNEL_OK")
</pallas_src>

<mosaic_0001>
module attributes {stable_mosaic.version = 11 : i64} {
  func.func @kernel(%arg0: i32, %arg1: i32, %arg2: memref<1x14x1024xf32, #tpu.memory_space<vmem>>, %arg3: memref<1x14x1024xf32, #tpu.memory_space<vmem>>, %arg4: memref<1x14x512xf32, #tpu.memory_space<vmem>>) attributes {dimension_semantics = [#tpu.dimension_semantics<parallel>, #tpu.dimension_semantics<arbitrary>], iteration_bounds = array<i64: 2, 1>, scalar_prefetch = 0 : i64, scratch_operands = 0 : i64, tpu.core_type = #tpu.core_type<tc>, window_params = [{transform_indices = @transform_0, window_bounds = array<i64: 1, 14, 1024>}, {transform_indices = @transform_1, window_bounds = array<i64: 1, 14, 1024>}, {transform_indices = @transform_2, window_bounds = array<i64: 1, 14, 512>}]} {
    %c0_i32 = arith.constant 0 : i32
    %0 = arith.cmpi eq, %arg1, %c0_i32 : i32
    %1 = arith.extui %0 : i1 to i32
    %c0_i32_0 = arith.constant 0 : i32
    %2 = arith.cmpi ne, %1, %c0_i32_0 : i32
    scf.if %2 {
      %cst_34 = arith.constant 0.000000e+00 : f32
      %55 = vector.broadcast %cst_34 : f32 to vector<1x14x512xf32>
      %c0_35 = arith.constant 0 : index
      %c0_36 = arith.constant 0 : index
      %c0_37 = arith.constant 0 : index
      %56 = vector.load %arg4[%c0_35, %c0_36, %c0_37] : memref<1x14x512xf32, #tpu.memory_space<vmem>>, vector<1x14x512xf32>
      tpu.vector_store %arg4[%c0_35, %c0_36, %c0_37], %55 {strides = array<i32>} : memref<1x14x512xf32, #tpu.memory_space<vmem>>, vector<1x14x512xf32>,
    } else {
    }
    %c0 = arith.constant 0 : index
    %c0_1 = arith.constant 0 : index
    %c0_2 = arith.constant 0 : index
    %3 = vector.load %arg2[%c0, %c0_1, %c0_2] : memref<1x14x1024xf32, #tpu.memory_space<vmem>>, vector<1x14x512xf32>
    %c0_3 = arith.constant 0 : index
    %c0_4 = arith.constant 0 : index
    %c0_5 = arith.constant 0 : index
    %4 = vector.load %arg3[%c0_3, %c0_4, %c0_5] : memref<1x14x1024xf32, #tpu.memory_space<vmem>>, vector<1x14x512xf32>
    %cst = arith.constant 0.000000e+00 : f32
    %cst_6 = arith.constant 1.000000e+00 : f32
    %5 = vector.broadcast %cst : f32 to vector<1x14x512xf32>
    %6 = arith.maximumf %5, %4 : vector<1x14x512xf32>
    %7 = vector.broadcast %cst_6 : f32 to vector<1x14x512xf32>
    %8 = arith.minimumf %7, %6 : vector<1x14x512xf32>
    %cst_7 = arith.constant 2.000000e-01 : f32
    %9 = vector.broadcast %cst_7 : f32 to vector<1x14x512xf32>
    %10 = arith.cmpf oge, %8, %9 : vector<1x14x512xf32>
    %cst_8 = arith.constant 1.000000e-01 : f32
    %11 = vector.broadcast %cst_8 : f32 to vector<1x14x512xf32>
    %12 = arith.cmpf oge, %8, %11 : vector<1x14x512xf32>
    %cst_9 = arith.constant 5.000000e-02 : f32
    %13 = vector.broadcast %cst_9 : f32 to vector<1x14x512xf32>
    %14 = arith.cmpf oge, %8, %13 : vector<1x14x512xf32>
    %cst_10 = arith.constant 2.000000e+00 : f32
    %cst_11 = arith.constant 1.000000e+00 : f32
    %15 = vector.broadcast %cst_10 : f32 to vector<1x14x512xf32>
    %16 = vector.broadcast %cst_11 : f32 to vector<1x14x512xf32>
    %17 = arith.select %14, %15, %16 : vector<1x14x512xi1>, vector<1x14x512xf32>
    %cst_12 = arith.constant 3.000000e+00 : f32
    %18 = vector.broadcast %cst_12 : f32 to vector<1x14x512xf32>
    %19 = arith.select %12, %18, %17 : vector<1x14x512xi1>, vector<1x14x512xf32>
    %cst_13 = arith.constant 3.000000e+01 : f32
    %20 = vector.broadcast %cst_13 : f32 to vector<1x14x512xf32>
    %21 = arith.select %10, %20, %19 : vector<1x14x512xi1>, vector<1x14x512xf32>
    %22 = arith.subf %3, %8 : vector<1x14x512xf32>
    %23 = arith.mulf %22, %22 : vector<1x14x512xf32>
    %24 = math.absf %22 : vector<1x14x512xf32>
    %25 = arith.addf %23, %24 : vector<1x14x512xf32>
    %26 = arith.mulf %21, %25 : vector<1x14x512xf32>
    %c0_14 = arith.constant 0 : index
    %c0_15 = arith.constant 0 : index
    %c512 = arith.constant 512 : index
    %27 = vector.load %arg2[%c0_14, %c0_15, %c512] : memref<1x14x1024xf32, #tpu.memory_space<vmem>>, vector<1x14x512xf32>
    %c0_16 = arith.constant 0 : index
    %c0_17 = arith.constant 0 : index
    %c512_18 = arith.constant 512 : index
    %28 = vector.load %arg3[%c0_16, %c0_17, %c512_18] : memref<1x14x1024xf32, #tpu.memory_space<vmem>>, vector<1x14x512xf32>
    %cst_19 = arith.constant 0.000000e+00 : f32
    %cst_20 = arith.constant 1.000000e+00 : f32
    %29 = vector.broadcast %cst_19 : f32 to vector<1x14x512xf32>
    %30 = arith.maximumf %29, %28 : vector<1x14x512xf32>
    %31 = vector.broadcast %cst_20 : f32 to vector<1x14x512xf32>
    %32 = arith.minimumf %31, %30 : vector<1x14x512xf32>
    %cst_21 = arith.constant 2.000000e-01 : f32
    %33 = vector.broadcast %cst_21 : f32 to vector<1x14x512xf32>
    %34 = arith.cmpf oge, %32, %33 : vector<1x14x512xf32>
    %cst_22 = arith.constant 1.000000e-01 : f32
    %35 = vector.broadcast %cst_22 : f32 to vector<1x14x512xf32>
    %36 = arith.cmpf oge, %32, %35 : vector<1x14x512xf32>
    %cst_23 = arith.constant 5.000000e-02 : f32
    %37 = vector.broadcast %cst_23 : f32 to vector<1x14x512xf32>
    %38 = arith.cmpf oge, %32, %37 : vector<1x14x512xf32>
    %cst_24 = arith.constant 2.000000e+00 : f32
    %cst_25 = arith.constant 1.000000e+00 : f32
    %39 = vector.broadcast %cst_24 : f32 to vector<1x14x512xf32>
    %40 = vector.broadcast %cst_25 : f32 to vector<1x14x512xf32>
    %41 = arith.select %38, %39, %40 : vector<1x14x512xi1>, vector<1x14x512xf32>
    %cst_26 = arith.constant 3.000000e+00 : f32
    %42 = vector.broadcast %cst_26 : f32 to vector<1x14x512xf32>
    %43 = arith.select %36, %42, %41 : vector<1x14x512xi1>, vector<1x14x512xf32>
    %cst_27 = arith.constant 3.000000e+01 : f32
    %44 = vector.broadcast %cst_27 : f32 to vector<1x14x512xf32>
    %45 = arith.select %34, %44, %43 : vector<1x14x512xi1>, vector<1x14x512xf32>
    %46 = arith.subf %27, %32 : vector<1x14x512xf32>
    %47 = arith.mulf %46, %46 : vector<1x14x512xf32>
    %48 = math.absf %46 : vector<1x14x512xf32>
    %49 = arith.addf %47, %48 : vector<1x14x512xf32>
    %50 = arith.mulf %45, %49 : vector<1x14x512xf32>
    %51 = arith.addf %26, %50 : vector<1x14x512xf32>
    %c0_28 = arith.constant 0 : index
    %c0_29 = arith.constant 0 : index
    %c0_30 = arith.constant 0 : index
    %52 = vector.load %arg4[%c0_28, %c0_29, %c0_30] : memref<1x14x512xf32, #tpu.memory_space<vmem>>, vector<1x14x512xf32>
    %53 = arith.addf %52, %51 : vector<1x14x512xf32>
    %c0_31 = arith.constant 0 : index
    %c0_32 = arith.constant 0 : index
    %c0_33 = arith.constant 0 : index
    %54 = vector.load %arg4[%c0_31, %c0_32, %c0_33] : memref<1x14x512xf32, #tpu.memory_space<vmem>>, vector<1x14x512xf32>
    tpu.vector_store %arg4[%c0_31, %c0_32, %c0_33], %53 {strides = array<i32>} : memref<1x14x512xf32, #tpu.memory_space<vmem>>, vector<1x14x512xf32>,
    return
  }
  func.func @transform_0(%arg0: i32, %arg1: i32) -> (i32, i32, i32) {
    %c0_i32 = arith.constant 0 : i32
    %c0_i32_0 = arith.constant 0 : i32
    return %arg0, %c0_i32, %arg1 : i32, i32, i32
  }
  func.func @transform_1(%arg0: i32, %arg1: i32) -> (i32, i32, i32) {
    %c0_i32 = arith.constant 0 : i32
    %c0_i32_0 = arith.constant 0 : i32
    return %arg0, %c0_i32, %arg1 : i32, i32, i32
  }
  func.func @transform_2(%arg0: i32, %arg1: i32) -> (i32, i32, i32) {
    %c0_i32 = arith.constant 0 : i32
    %c0_i32_0 = arith.constant 0 : i32
    %c0_i32_1 = arith.constant 0 : i32
    return %arg0, %c0_i32, %c0_i32_0 : i32, i32, i32
  }
}

</mosaic_0001>

<llo_original>
// kernel: tpu_custom_call.1
$region0: #{tpu_custom_call.1}
  #allocation0 [shape = 'u32[]', space=smem, size = 0x4, offset = 0x4, fixed_abs, tag = 'smem constant byte address 0x4 - core index']
  #allocation1 [shape = 'u32[144,128]{1,0:T(1,128)}', space=vmem, size = 0x12000, scoped, tag = 'internal scratch']
  %s0 = inlined_call_operand.vmem [shape: f32[2,14,1024], index: 0, kind: input, shape index: {}]
  %s1 = inlined_call_operand.vmem [shape: f32[2,14,1024], index: 1, kind: input, shape index: {}]
  %s2 = inlined_call_operand.vmem [shape: f32[2,14,512], index: 2, kind: output, shape index: {}]
  %s3 = sld [smem:[#allocation0]]
  $region45: #{tpu_custom_call.1} parent=0
    _
  %s5 = ssub.s32 1, %s3
  %s6 = scalar_select 0, %s5, %s3
  loop: start=0, step=1, limit=4
  $region2: #{tpu_custom_call.1} parent=0 // loop_pre_header
    _
  $region3: #{tpu_custom_call.1} parent=0 // loop_header
    %s8 = sphi 0, %s12
    %p9 = scmp.ge.s32.totalorder %s8, 4
    %s15 = sphi 0, %s27
    %s16 = sphi 0, %s23
    %s17 = sphi 0, %s15
    %s18 = sphi 0, %s16
    %s19 = sphi 0, %s17
    %s20 = sphi 0, %s18
    %s32 = sphi 0, %s34
    %s35 = sphi 0, %s32
    %s36 = sphi 0, %s35
    %s52 = sphi 0, %s36
    %s60 = sphi 0, %s62
    %s63 = sphi 0, %s60
    %s64 = sphi 0, %s63
    %s80 = sphi 0, %s64
    %s86 = sphi 0, %s88
    %s89 = sphi 0, %s86
    %s90 = sphi 0, %s89
    %s106 = sphi 0, %s90
  $region4: #{tpu_custom_call.1} parent=0 // loop_header_branch
    %11 = sbr.rel (%p9) target = $region8
  $region5: #{tpu_custom_call.1} parent=0 // loop_body
    %s13 = ssub.s32 %s8, 1
    %s14 = ssub.s32 %s8, 2
    %s21 = sadd.s32 1, %s16
    %p22 = scmp.ge.s32.totalorder %s21, 1
    %s23 = scalar_select %p22, 0, %s21
    %s24 = sadd.s32 1, %s15
    %s25 = scalar_select %p22, %s24, %s15
    %p26 = scmp.ge.s32.totalorder %s25, 2
    %s27 = scalar_select %p26, 0, %s25
    %s28 = ssub.s32 %s15, %s27
    %s29 = ssub.s32 %s16, %s23
    %s30 = sor.u32 %s28, %s29
    %p31 = scmp.eq.s32.totalorder %s30, 0
    %s33 = sadd.s32 %s32, 1
    %s34 = scalar_select %p31, %s32, %s33
    %p37 = pneg %p31
    %p38 = scmp.eq.s32.totalorder %s8, 1
    %p39 = por %p37, %p38
    %p40 = scmp.ne.s32.totalorder %s32, %s35
    %p41 = scmp.eq.s32.totalorder %s8, 0
    %p42 = por %p40, %p41
    %p43 = scmp.ne.s32.totalorder %s32, %s35
    %p44 = scmp.eq.s32.totalorder %s13, 1
    %p45 = por %p43, %p44
    %p46 = scmp.ne.s32.totalorder %s35, %s36
    %p47 = scmp.eq.s32.totalorder %s13, 0
    %p48 = por %p46, %p47
    %p49 = scmp.ne.s32.totalorder %s35, %s36
    %p50 = scmp.eq.s32.totalorder %s14, 1
    %p51 = por %p49, %p50
    %p53 = scmp.ne.s32.totalorder %s36, %s52
    %p54 = scmp.eq.s32.totalorder %s14, 0
    %p55 = por %p53, %p54
    %s56 = ssub.s32 %s15, %s27
    %s57 = ssub.s32 %s16, %s23
    %s58 = sor.u32 %s56, %s57
    %p59 = scmp.eq.s32.totalorder %s58, 0
    %s61 = sadd.s32 %s60, 1
    %s62 = scalar_select %p59, %s60, %s61
    %p65 = pneg %p59
    %p66 = scmp.eq.s32.totalorder %s8, 1
    %p67 = por %p65, %p66
    %p68 = scmp.ne.s32.totalorder %s60, %s63
    %p69 = scmp.eq.s32.totalorder %s8, 0
    %p70 = por %p68, %p69
    %p71 = scmp.ne.s32.totalorder %s60, %s63
    %p72 = scmp.eq.s32.totalorder %s13, 1
    %p73 = por %p71, %p72
    %p74 = scmp.ne.s32.totalorder %s63, %s64
    %p75 = scmp.eq.s32.totalorder %s13, 0
    %p76 = por %p74, %p75
    %p77 = scmp.ne.s32.totalorder %s63, %s64
    %p78 = scmp.eq.s32.totalorder %s14, 1
    %p79 = por %p77, %p78
    %p81 = scmp.ne.s32.totalorder %s64, %s80
    %p82 = scmp.eq.s32.totalorder %s14, 0
    %p83 = por %p81, %p82
    %s84 = ssub.s32 %s15, %s27
    %p85 = scmp.eq.s32.totalorder %s84, 0
    %s87 = sadd.s32 %s86, 1
    %s88 = scalar_select %p85, %s86, %s87
    %p91 = pneg %p85
    %p92 = scmp.eq.s32.totalorder %s8, 1
    %p93 = por %p91, %p92
    %p94 = scmp.ne.s32.totalorder %s86, %s89
    %p95 = scmp.eq.s32.totalorder %s8, 0
    %p96 = por %p94, %p95
    %p97 = scmp.ne.s32.totalorder %s86, %s89
    %p98 = scmp.eq.s32.totalorder %s13, 1
    %p99 = por %p97, %p98
    %p100 = scmp.ne.s32.totalorder %s89, %s90
    %p101 = scmp.eq.s32.totalorder %s13, 0
    %p102 = por %p100, %p101
    %p103 = scmp.ne.s32.totalorder %s89, %s90
    %p104 = scmp.eq.s32.totalorder %s14, 1
    %p105 = por %p103, %p104
    %p107 = scmp.ne.s32.totalorder %s90, %s106
    %p108 = scmp.eq.s32.totalorder %s14, 0
    %p109 = por %p107, %p108
    %p110 = scmp.le.s32.totalorder 1, %s8
    %p111 = scmp.lt.s32.totalorder %s8, 3
    %p112 = pnand %p110, %p111
    %p113 = pneg %p112
    // Predicated region
    $region9: #{tpu_custom_call.1} parent=5 // pred_check
      _
    $region10: #{tpu_custom_call.1} parent=5 // pred_check_branch
      %115 = sbr.rel (%p112) target = $region12
    $region11: #{tpu_custom_call.1} parent=5 // pred_region
      %s116 = ssub.s32 %s8, 1
    $region12: #{tpu_custom_call.1} parent=5 // pred_fallthru
      _
    %p117 = scmp.lt.s32.totalorder %s8, 2
    // Predicated region
    $region13: #{tpu_custom_call.1} parent=5 // pred_check
      %p118 = pneg %p117
    $region14: #{tpu_custom_call.1} parent=5 // pred_check_branch
      %120 = sbr.rel (%p118) target = $region16
    $region15: #{tpu_custom_call.1} parent=5 // pred_region
      // Predicated region
      $region17: #{tpu_custom_call.1} parent=15 // pred_check
        %p121 = pneg %p42
      $region18: #{tpu_custom_call.1} parent=15 // pred_check_branch
        %123 = sbr.rel (%p121) target = $region20
      $region19: #{tpu_custom_call.1} parent=15 // pred_region
        %s124 = smul.u32 8, %s16
        %p125 = scmp.lt.s32.totalorder %s15, 1
        %s126 = scalar_select %p125, %s15, 1
        %p127 = scmp.lt.s32.totalorder %s124, 7
        %s128 = scalar_select %p127, %s124, 7
        %s129 = smul.addr %s126, 16
        %s130 = sadd.s32 %s128, %s129
        %s131 = smul.addr %s130, 8
        %s132 = scalar_lea.vmem %s0, %s131
        %s133 = smul.u32 8, %s16
      $region20: #{tpu_custom_call.1} parent=15 // pred_fallthru
        _
      // Predicated region
      $region21: #{tpu_custom_call.1} parent=15 // pred_check
        %p134 = pneg %p70
      $region22: #{tpu_custom_call.1} parent=15 // pred_check_branch
        %136 = sbr.rel (%p134) target = $region24
      $region23: #{tpu_custom_call.1} parent=15 // pred_region
        %s137 = smul.u32 8, %s16
        %p138 = scmp.lt.s32.totalorder %s15, 1
        %s139 = scalar_select %p138, %s15, 1
        %p140 = scmp.lt.s32.totalorder %s137, 7
        %s141 = scalar_select %p140, %s137, 7
        %s142 = smul.addr %s139, 16
        %s143 = sadd.s32 %s141, %s142
        %s144 = smul.addr %s143, 8
        %s145 = scalar_lea.vmem %s1, %s144
        %s146 = smul.u32 8, %s16
      $region24: #{tpu_custom_call.1} parent=15 // pred_fallthru
        _
    $region16: #{tpu_custom_call.1} parent=5 // pred_fallthru
      _
    %p147 = scmp.le.s32.totalorder 1, %s8
    %p148 = scmp.lt.s32.totalorder %s8, 3
    %p149 = pnand %p147, %p148
    %p150 = pneg %p149
    // Predicated region
    $region25: #{tpu_custom_call.1} parent=5 // pred_check
      _
    $region26: #{tpu_custom_call.1} parent=5 // pred_check_branch
      %152 = sbr.rel (%p149) target = $region28
    $region27: #{tpu_custom_call.1} parent=5 // pred_region
      %s153 = ssub.s32 %s8, 1
      %s154 = smul.u32 8, %s18
      %p155 = scmp.lt.s32.totalorder %s17, 1
      %s156 = scalar_select %p155, %s17, 1
      %p157 = scmp.lt.s32.totalorder %s154, 7
      %s158 = scalar_select %p157, %s154, 7
      %s159 = smul.addr %s156, 16
      %s160 = sadd.s32 %s158, %s159
      %s161 = smul.addr %s160, 8
      %s162 = scalar_lea.vmem %s0, %s161
      %p163 = pneg %p48
      %p164 = pneg %p45
      %s165 = smul.u32 8, %s18
      %p166 = scmp.lt.s32.totalorder %s17, 1
      %s167 = scalar_select %p166, %s17, 1
      %p168 = scmp.lt.s32.totalorder %s165, 7
      %s169 = scalar_select %p168, %s165, 7
      %s170 = smul.addr %s167, 16
      %s171 = sadd.s32 %s169, %s170
      %s172 = smul.addr %s171, 8
      %s173 = scalar_lea.vmem %s1, %s172
      %p174 = pneg %p76
      %p175 = pneg %p73
      %p176 = pneg %p102
      %p177 = pneg %p99
      %p178 = scmp.lt.s32.totalorder %s17, 1
      %s179 = scalar_select %p178, %s17, 1
      %s180 = smul.addr %s179, 8
      %s181 = smul.addr %s180, 8
      %s182 = scalar_lea.vmem %s2, %s181
      %s183 = smul.u32 8, %s18
      %p184 = scmp.lt.s32.totalorder %s17, 1
      %s185 = scalar_select %p184, %s17, 1
      %p186 = scmp.lt.s32.totalorder %s183, 7
      %s187 = scalar_select %p186, %s183, 7
      %s188 = smul.addr %s185, 16
      %s189 = sadd.s32 %s187, %s188
      %s190 = smul.addr %s189, 8
      %s191 = scalar_lea.vmem %s0, %s190
      %s192 = smul.u32 8, %s18
      %s193 = smul.u32 8, %s18
      %p194 = scmp.lt.s32.totalorder %s17, 1
      %s195 = scalar_select %p194, %s17, 1
      %p196 = scmp.lt.s32.totalorder %s193, 7
      %s197 = scalar_select %p196, %s193, 7
      %s198 = smul.addr %s195, 16
      %s199 = sadd.s32 %s197, %s198
      %s200 = smul.addr %s199, 8
      %s201 = scalar_lea.vmem %s1, %s200
      %s202 = smul.u32 8, %s18
      %p203 = scmp.lt.s32.totalorder %s17, 1
      %s204 = scalar_select %p203, %s17, 1
      %s205 = smul.addr %s204, 8
      %s206 = smul.addr %s205, 8
      %s207 = scalar_lea.vmem %s2, %s206
      %p208 = scmp.eq.s32.totalorder %s18, 0
      // Predicated region
      $region29: #{tpu_custom_call.1} parent=27 // pred_check
        %p209 = pneg %p208
      $region30: #{tpu_custom_call.1} parent=27 // pred_check_branch
        %211 = sbr.rel (%p209) target = $region32
      $region31: #{tpu_custom_call.1} parent=27 // pred_region
        %212 = vst [vmem:[%s207] sm:$0xff] 0.0
        %213 = vst [vmem:[%s207 + $0x8] sm:$0xff] 0.0
        %214 = vst [vmem:[%s207 + $0x10] sm:$0xff] 0.0
        %215 = vst [vmem:[%s207 + $0x18] sm:$0xff] 0.0
        %216 = vst [vmem:[%s207 + $0x20] sm:$0x3f] 0.0
        %217 = vst [vmem:[%s207 + $0x28] sm:$0x3f] 0.0
        %218 = vst [vmem:[%s207 + $0x30] sm:$0x3f] 0.0
        %219 = vst [vmem:[%s207 + $0x38] sm:$0x3f] 0.0
      $region32: #{tpu_custom_call.1} parent=27 // pred_fallthru
        _
      %v220 = vld [vmem:[%s191] sm:$0xff]
      %v221 = vld [vmem:[%s191 + $0x8] sm:$0xff]
      %v222 = vld [vmem:[%s191 + $0x10] sm:$0xff]
      %v223 = vld [vmem:[%s191 + $0x18] sm:$0xff]
      %v224 = vld [vmem:[%s191 + $0x40] sm:$0x3f]
      %v225 = vld [vmem:[%s191 + $0x48] sm:$0x3f]
      %v226 = vld [vmem:[%s191 + $0x50] sm:$0x3f]
      %v227 = vld [vmem:[%s191 + $0x58] sm:$0x3f]
      %v228 = vld [vmem:[%s201] sm:$0xff]
      %v229 = vld [vmem:[%s201 + $0x8] sm:$0xff]
      %v230 = vld [vmem:[%s201 + $0x10] sm:$0xff]
      %v231 = vld [vmem:[%s201 + $0x18] sm:$0xff]
      %v232 = vld [vmem:[%s201 + $0x40] sm:$0x3f]
      %v233 = vld [vmem:[%s201 + $0x48] sm:$0x3f]
      %v234 = vld [vmem:[%s201 + $0x50] sm:$0x3f]
      %v235 = vld [vmem:[%s201 + $0x58] sm:$0x3f]
      %v236 = vmax.f32 %v228, 0.0
      %v237 = vmax.f32 %v229, 0.0
      %v238 = vmax.f32 %v230, 0.0
      %v239 = vmax.f32 %v231, 0.0
      %v240 = vmax.f32 %v232, 0.0
      %v241 = vmax.f32 %v233, 0.0
      %v242 = vmax.f32 %v234, 0.0
      %v243 = vmax.f32 %v235, 0.0
      %v244 = vmin.f32 %v236, 1.0
      %v245 = vmin.f32 %v237, 1.0
      %v246 = vmin.f32 %v238, 1.0
      %v247 = vmin.f32 %v239, 1.0
      %v248 = vmin.f32 %v240, 1.0
      %v249 = vmin.f32 %v241, 1.0
      %v250 = vmin.f32 %v242, 1.0
      %v251 = vmin.f32 %v243, 1.0
      %vm252 = vcmp.ge.f32.partialorder %v244, 0.2
      %vm253 = vcmp.ge.f32.partialorder %v245, 0.2
      %vm254 = vcmp.ge.f32.partialorder %v246, 0.2
      %vm255 = vcmp.ge.f32.partialorder %v247, 0.2
      %vm256 = vcmp.ge.f32.partialorder %v248, 0.2
      %vm257 = vcmp.ge.f32.partialorder %v249, 0.2
      %vm258 = vcmp.ge.f32.partialorder %v250, 0.2
      %vm259 = vcmp.ge.f32.partialorder %v251, 0.2
      %vm260 = vcmp.ge.f32.partialorder %v244, 0.1
      %vm261 = vcmp.ge.f32.partialorder %v245, 0.1
      %vm262 = vcmp.ge.f32.partialorder %v246, 0.1
      %vm263 = vcmp.ge.f32.partialorder %v247, 0.1
      %vm264 = vcmp.ge.f32.partialorder %v248, 0.1
      %vm265 = vcmp.ge.f32.partialorder %v249, 0.1
      %vm266 = vcmp.ge.f32.partialorder %v250, 0.1
      %vm267 = vcmp.ge.f32.partialorder %v251, 0.1
      %vm268 = vcmp.ge.f32.partialorder %v244, 0.05
      %vm269 = vcmp.ge.f32.partialorder %v245, 0.05
      %vm270 = vcmp.ge.f32.partialorder %v246, 0.05
      %vm271 = vcmp.ge.f32.partialorder %v247, 0.05
      %vm272 = vcmp.ge.f32.partialorder %v248, 0.05
      %vm273 = vcmp.ge.f32.partialorder %v249, 0.05
      %vm274 = vcmp.ge.f32.partialorder %v250, 0.05
      %vm275 = vcmp.ge.f32.partialorder %v251, 0.05
      %v276 = vsel %vm268, 2.0, 1.0
      %v277 = vsel %vm269, 2.0, 1.0
      %v278 = vsel %vm270, 2.0, 1.0
      %v279 = vsel %vm271, 2.0, 1.0
      %v280 = vsel %vm272, 2.0, 1.0
      %v281 = vsel %vm273, 2.0, 1.0
      %v282 = vsel %vm274, 2.0, 1.0
      %v283 = vsel %vm275, 2.0, 1.0
      %v284 = vsel %vm260, 3.0, %v276
      %v285 = vsel %vm261, 3.0, %v277
      %v286 = vsel %vm262, 3.0, %v278
      %v287 = vsel %vm263, 3.0, %v279
      %v288 = vsel %vm264, 3.0, %v280
      %v289 = vsel %vm265, 3.0, %v281
      %v290 = vsel %vm266, 3.0, %v282
      %v291 = vsel %vm267, 3.0, %v283
      %v292 = vsel %vm252, 30.0, %v284
      %v293 = vsel %vm253, 30.0, %v285
      %v294 = vsel %vm254, 30.0, %v286
      %v295 = vsel %vm255, 30.0, %v287
      %v296 = vsel %vm256, 30.0, %v288
      %v297 = vsel %vm257, 30.0, %v289
      %v298 = vsel %vm258, 30.0, %v290
      %v299 = vsel %vm259, 30.0, %v291
      %v300 = vsub.f32 %v220, %v244
      %v301 = vsub.f32 %v221, %v245
      %v302 = vsub.f32 %v222, %v246
      %v303 = vsub.f32 %v223, %v247
      %v304 = vsub.f32 %v224, %v248
      %v305 = vsub.f32 %v225, %v249
      %v306 = vsub.f32 %v226, %v250
      %v307 = vsub.f32 %v227, %v251
      %v308 = vmul.f32 %v300, %v300
      %v309 = vmul.f32 %v301, %v301
      %v310 = vmul.f32 %v302, %v302
      %v311 = vmul.f32 %v303, %v303
      %v312 = vmul.f32 %v304, %v304
      %v313 = vmul.f32 %v305, %v305
      %v314 = vmul.f32 %v306, %v306
      %v315 = vmul.f32 %v307, %v307
      %v316 = vand.u32 2147483647, %v300
      %v317 = vand.u32 2147483647, %v301
      %v318 = vand.u32 2147483647, %v302
      %v319 = vand.u32 2147483647, %v303
      %v320 = vand.u32 2147483647, %v304
      %v321 = vand.u32 2147483647, %v305
      %v322 = vand.u32 2147483647, %v306
      %v323 = vand.u32 2147483647, %v307
      %v324 = vadd.f32 %v308, %v316
      %v325 = vadd.f32 %v309, %v317
      %v326 = vadd.f32 %v310, %v318
      %v327 = vadd.f32 %v311, %v319
      %v328 = vadd.f32 %v312, %v320
      %v329 = vadd.f32 %v313, %v321
      %v330 = vadd.f32 %v314, %v322
      %v331 = vadd.f32 %v315, %v323
      %v332 = vmul.f32 %v292, %v324
      %v333 = vmul.f32 %v293, %v325
      %v334 = vmul.f32 %v294, %v326
      %v335 = vmul.f32 %v295, %v327
      %v336 = vmul.f32 %v296, %v328
      %v337 = vmul.f32 %v297, %v329
      %v338 = vmul.f32 %v298, %v330
      %v339 = vmul.f32 %v299, %v331
      %v340 = vld [vmem:[%s191 + $0x20] sm:$0xff]
      %v341 = vld [vmem:[%s191 + $0x28] sm:$0xff]
      %v342 = vld [vmem:[%s191 + $0x30] sm:$0xff]
      %v343 = vld [vmem:[%s191 + $0x38] sm:$0xff]
      %v344 = vld [vmem:[%s191 + $0x60] sm:$0x3f]
      %v345 = vld [vmem:[%s191 + $0x68] sm:$0x3f]
      %v346 = vld [vmem:[%s191 + $0x70] sm:$0x3f]
      %v347 = vld [vmem:[%s191 + $0x78] sm:$0x3f]
      %v348 = vld [vmem:[%s201 + $0x20] sm:$0xff]
      %v349 = vld [vmem:[%s201 + $0x28] sm:$0xff]
      %v350 = vld [vmem:[%s201 + $0x30] sm:$0xff]
      %v351 = vld [vmem:[%s201 + $0x38] sm:$0xff]
      %v352 = vld [vmem:[%s201 + $0x60] sm:$0x3f]
      %v353 = vld [vmem:[%s201 + $0x68] sm:$0x3f]
      %v354 = vld [vmem:[%s201 + $0x70] sm:$0x3f]
      %v355 = vld [vmem:[%s201 + $0x78] sm:$0x3f]
      %v356 = vmax.f32 %v348, 0.0
      %v357 = vmax.f32 %v349, 0.0
      %v358 = vmax.f32 %v350, 0.0
      %v359 = vmax.f32 %v351, 0.0
      %v360 = vmax.f32 %v352, 0.0
      %v361 = vmax.f32 %v353, 0.0
      %v362 = vmax.f32 %v354, 0.0
      %v363 = vmax.f32 %v355, 0.0
      %v364 = vmin.f32 %v356, 1.0
      %v365 = vmin.f32 %v357, 1.0
      %v366 = vmin.f32 %v358, 1.0
      %v367 = vmin.f32 %v359, 1.0
      %v368 = vmin.f32 %v360, 1.0
      %v369 = vmin.f32 %v361, 1.0
      %v370 = vmin.f32 %v362, 1.0
      %v371 = vmin.f32 %v363, 1.0
      %vm372 = vcmp.ge.f32.partialorder %v364, 0.2
      %vm373 = vcmp.ge.f32.partialorder %v365, 0.2
      %vm374 = vcmp.ge.f32.partialorder %v366, 0.2
      %vm375 = vcmp.ge.f32.partialorder %v367, 0.2
      %vm376 = vcmp.ge.f32.partialorder %v368, 0.2
      %vm377 = vcmp.ge.f32.partialorder %v369, 0.2
      %vm378 = vcmp.ge.f32.partialorder %v370, 0.2
      %vm379 = vcmp.ge.f32.partialorder %v371, 0.2
      %vm380 = vcmp.ge.f32.partialorder %v364, 0.1
      %vm381 = vcmp.ge.f32.partialorder %v365, 0.1
      %vm382 = vcmp.ge.f32.partialorder %v366, 0.1
      %vm383 = vcmp.ge.f32.partialorder %v367, 0.1
      %vm384 = vcmp.ge.f32.partialorder %v368, 0.1
      %vm385 = vcmp.ge.f32.partialorder %v369, 0.1
      %vm386 = vcmp.ge.f32.partialorder %v370, 0.1
      %vm387 = vcmp.ge.f32.partialorder %v371, 0.1
      %vm388 = vcmp.ge.f32.partialorder %v364, 0.05
      %vm389 = vcmp.ge.f32.partialorder %v365, 0.05
      %vm390 = vcmp.ge.f32.partialorder %v366, 0.05
      %vm391 = vcmp.ge.f32.partialorder %v367, 0.05
      %vm392 = vcmp.ge.f32.partialorder %v368, 0.05
      %vm393 = vcmp.ge.f32.partialorder %v369, 0.05
      %vm394 = vcmp.ge.f32.partialorder %v370, 0.05
      %vm395 = vcmp.ge.f32.partialorder %v371, 0.05
      %v396 = vsel %vm388, 2.0, 1.0
      %v397 = vsel %vm389, 2.0, 1.0
      %v398 = vsel %vm390, 2.0, 1.0
      %v399 = vsel %vm391, 2.0, 1.0
      %v400 = vsel %vm392, 2.0, 1.0
      %v401 = vsel %vm393, 2.0, 1.0
      %v402 = vsel %vm394, 2.0, 1.0
      %v403 = vsel %vm395, 2.0, 1.0
      %v404 = vsel %vm380, 3.0, %v396
      %v405 = vsel %vm381, 3.0, %v397
      %v406 = vsel %vm382, 3.0, %v398
      %v407 = vsel %vm383, 3.0, %v399
      %v408 = vsel %vm384, 3.0, %v400
      %v409 = vsel %vm385, 3.0, %v401
      %v410 = vsel %vm386, 3.0, %v402
      %v411 = vsel %vm387, 3.0, %v403
      %v412 = vsel %vm372, 30.0, %v404
      %v413 = vsel %vm373, 30.0, %v405
      %v414 = vsel %vm374, 30.0, %v406
      %v415 = vsel %vm375, 30.0, %v407
      %v416 = vsel %vm376, 30.0, %v408
      %v417 = vsel %vm377, 30.0, %v409
      %v418 = vsel %vm378, 30.0, %v410
      %v419 = vsel %vm379, 30.0, %v411
      %v420 = vsub.f32 %v340, %v364
      %v421 = vsub.f32 %v341, %v365
      %v422 = vsub.f32 %v342, %v366
      %v423 = vsub.f32 %v343, %v367
      %v424 = vsub.f32 %v344, %v368
      %v425 = vsub.f32 %v345, %v369
      %v426 = vsub.f32 %v346, %v370
      %v427 = vsub.f32 %v347, %v371
      %v428 = vmul.f32 %v420, %v420
      %v429 = vmul.f32 %v421, %v421
      %v430 = vmul.f32 %v422, %v422
      %v431 = vmul.f32 %v423, %v423
      %v432 = vmul.f32 %v424, %v424
      %v433 = vmul.f32 %v425, %v425
      %v434 = vmul.f32 %v426, %v426
      %v435 = vmul.f32 %v427, %v427
      %v436 = vand.u32 2147483647, %v420
      %v437 = vand.u32 2147483647, %v421
      %v438 = vand.u32 2147483647, %v422
      %v439 = vand.u32 2147483647, %v423
      %v440 = vand.u32 2147483647, %v424
      %v441 = vand.u32 2147483647, %v425
      %v442 = vand.u32 2147483647, %v426
      %v443 = vand.u32 2147483647, %v427
      %v444 = vadd.f32 %v428, %v436
      %v445 = vadd.f32 %v429, %v437
      %v446 = vadd.f32 %v430, %v438
      %v447 = vadd.f32 %v431, %v439
      %v448 = vadd.f32 %v432, %v440
      %v449 = vadd.f32 %v433, %v441
      %v450 = vadd.f32 %v434, %v442
      %v451 = vadd.f32 %v435, %v443
      %v452 = vmul.f32 %v412, %v444
      %v453 = vmul.f32 %v413, %v445
      %v454 = vmul.f32 %v414, %v446
      %v455 = vmul.f32 %v415, %v447
      %v456 = vmul.f32 %v416, %v448
      %v457 = vmul.f32 %v417, %v449
      %v458 = vmul.f32 %v418, %v450
      %v459 = vmul.f32 %v419, %v451
      %v460 = vadd.f32 %v332, %v452
      %v461 = vadd.f32 %v333, %v453
      %v462 = vadd.f32 %v334, %v454
      %v463 = vadd.f32 %v335, %v455
      %v464 = vadd.f32 %v336, %v456
      %v465 = vadd.f32 %v337, %v457
      %v466 = vadd.f32 %v338, %v458
      %v467 = vadd.f32 %v339, %v459
      %v468 = vld [vmem:[%s207] sm:$0xff]
      %v469 = vld [vmem:[%s207 + $0x8] sm:$0xff]
      %v470 = vld [vmem:[%s207 + $0x10] sm:$0xff]
      %v471 = vld [vmem:[%s207 + $0x18] sm:$0xff]
      %v472 = vld [vmem:[%s207 + $0x20] sm:$0x3f]
      %v473 = vld [vmem:[%s207 + $0x28] sm:$0x3f]
      %v474 = vld [vmem:[%s207 + $0x30] sm:$0x3f]
      %v475 = vld [vmem:[%s207 + $0x38] sm:$0x3f]
      %v476 = vadd.f32 %v468, %v460
      %v477 = vadd.f32 %v469, %v461
      %v478 = vadd.f32 %v470, %v462
      %v479 = vadd.f32 %v471, %v463
      %v480 = vadd.f32 %v472, %v464
      %v481 = vadd.f32 %v473, %v465
      %v482 = vadd.f32 %v474, %v466
      %v483 = vadd.f32 %v475, %v467
      %484 = vst [vmem:[%s207] sm:$0xff] %v476
      %485 = vst [vmem:[%s207 + $0x8] sm:$0xff] %v477
      %486 = vst [vmem:[%s207 + $0x10] sm:$0xff] %v478
      %487 = vst [vmem:[%s207 + $0x18] sm:$0xff] %v479
      %488 = vst [vmem:[%s207 + $0x20] sm:$0x3f] %v480
      %489 = vst [vmem:[%s207 + $0x28] sm:$0x3f] %v481
      %490 = vst [vmem:[%s207 + $0x30] sm:$0x3f] %v482
      %491 = vst [vmem:[%s207 + $0x38] sm:$0x3f] %v483
      %p492 = scmp.lt.s32.totalorder %s17, 1
      %s493 = scalar_select %p492, %s17, 1
      %s494 = smul.addr %s493, 8
      %s495 = smul.addr %s494, 8
      %s496 = scalar_lea.vmem %s2, %s495
      // Predicated region
      $region33: #{tpu_custom_call.1} parent=27 // pred_check
        %p497 = pneg %p99
      $region34: #{tpu_custom_call.1} parent=27 // pred_check_branch
        %499 = sbr.rel (%p497) target = $region36
      $region35: #{tpu_custom_call.1} parent=27 // pred_region
        _
      $region36: #{tpu_custom_call.1} parent=27 // pred_fallthru
        _
    $region28: #{tpu_custom_call.1} parent=5 // pred_fallthru
      _
    %p500 = scmp.le.s32.totalorder 2, %s8
    // Predicated region
    $region37: #{tpu_custom_call.1} parent=5 // pred_check
      %p501 = pneg %p500
    $region38: #{tpu_custom_call.1} parent=5 // pred_check_branch
      %503 = sbr.rel (%p501) target = $region40
    $region39: #{tpu_custom_call.1} parent=5 // pred_region
      %s504 = ssub.s32 %s8, 2
      // Predicated region
      $region41: #{tpu_custom_call.1} parent=39 // pred_check
        %p505 = pneg %p105
      $region42: #{tpu_custom_call.1} parent=39 // pred_check_branch
        %507 = sbr.rel (%p505) target = $region44
      $region43: #{tpu_custom_call.1} parent=39 // pred_region
        %p508 = scmp.lt.s32.totalorder %s19, 1
        %s509 = scalar_select %p508, %s19, 1
        %s510 = smul.addr %s509, 8
        %s511 = smul.addr %s510, 8
        %s512 = scalar_lea.vmem %s2, %s511
      $region44: #{tpu_custom_call.1} parent=39 // pred_fallthru
        _
    $region40: #{tpu_custom_call.1} parent=5 // pred_fallthru
      _
  $region6: #{tpu_custom_call.1} parent=0 // loop_footer
    %s12 = sadd.s32 1, %s8
  $region7: #{tpu_custom_call.1} parent=0 // loop_footer_branch
    %7 = sbr.rel target = $region3
  $region8: #{tpu_custom_call.1} parent=0 // loop_exit
    _

</llo_original>
